<compile_context>
chip_gen: v6e
topology: v6e:2x2x1
jax: 0.10.0
libtpu: 0.0.40
codegen_flags: <defaults>
</compile_context>

<pallas_src>
import functools
import math

import jax
import jax.numpy as jnp
from jax.experimental import pallas as pl
from jax.experimental.pallas import tpu as pltpu


_MIN_GRID_STEPS = 8   # keep the DMA pipeline busy + let v7x split rows over 2 TCs
_MAX_FOLD = 16        # cap MXU work of the lane-dense fold at ~4*fold flops/elem


def _round_up(x: int, m: int) -> int:
    return ((x + m - 1) // m) * m


def _tpu_budgets() -> tuple[int, int]:
    """(vmem_limit_bytes, per-buffer tile byte cap) per TPU generation."""
    try:
        kind = jax.devices()[0].device_kind.lower()
    except Exception:  # pragma: no cover - defensive
        kind = ""
    if ("v5" in kind) or ("v6" in kind):   # 128 MiB physical VMEM per TC
        return 64 * 1024 * 1024, 4 * 1024 * 1024
    # v7x has only 64 MiB VMEM per TC; unknown devices -> conservative.
    return 32 * 1024 * 1024, 2 * 1024 * 1024


def _srmsnorm_kernel(x_ref, y_ref, *, eps: float):
    """Plain path (N is a multiple of 128): reduce over the lane axis."""
    x = x_ref[...].astype(jnp.float32)
    sumsq = jnp.sum(x * x, axis=-1, keepdims=True)
    rstd = jax.lax.rsqrt(sumsq * (1.0 / x.shape[-1]) + eps)
    y_ref[...] = (x * rstd).astype(y_ref.dtype)


def _srmsnorm_folded_kernel(x_ref, seg_ref, segt_ref, y_ref, *, eps: float, n: int):
    """Lane-dense path: each VMEM row packs `fold` logical rows of width n.

    Per-segment sum of squares is done with two thin matmuls on the
    (otherwise idle) MXU:
      ssq   = (x*x) @ S    : (bm, fold*n) @ (fold*n, F) -> (bm, F)
      sumsq = ssq   @ S^T  : (bm, F) @ (F, fold*n)      -> (bm, fold*n)
    S is 0/1 with one nonzero per row, so the broadcast-back matmul is exact;
    both are passed in as resident constants (constant index_map).
    """
    x = x_ref[...].astype(jnp.float32)
    xx = x * x
    ssq = jnp.dot(xx, seg_ref[...], preferred_element_type=jnp.float32)
    sumsq = jnp.dot(ssq, segt_ref[...], preferred_element_type=jnp.float32)
    rstd = jax.lax.rsqrt(sumsq * (1.0 / n) + eps)
    y_ref[...] = (x * rstd).astype(y_ref.dtype)


def simple_rms_norm(x: jax.Array, eps: float = 1e-6, *, block_m: int | None = None) -> jax.Array:
    """Pallas TPU implementation of SimpleRMSNorm.forward (srms_norm_fw)."""
    if x.dtype == jnp.float16:
        eps = max(eps, 1.6e-5)

    orig_shape = x.shape
    N = orig_shape[-1]
    M = 1
    for d in orig_shape[:-1]:
        M *= d

    # Lane-dense fold: pack `fold` consecutive logical rows into one lane row
    # whenever N is not already a multiple of 128 and the required fold is
    # small.  (M, N) -> (M/fold, fold*N) is a free, contiguous reshape.
    fold = 1
    if N % 128 != 0:
        cand = 128 // math.gcd(N, 128)
        if cand <= _MAX_FOLD:
            fold = cand

    x2d_rows = x.reshape(M, N)
    pad_rows = (-M) % fold
    if pad_rows:
        # < fold zero rows: they normalize to 0 (eps > 0) and are sliced off.
        x2d_rows = jnp.pad(x2d_rows, ((0, pad_rows), (0, 0)))
    M_pad = M + pad_rows
    M_rows = M_pad // fold
    N_eff = fold * N
    x2d = x2d_rows.reshape(M_rows, N_eff)

    itemsize = jnp.dtype(x.dtype).itemsize
    # sublane packing: 8 rows/vreg for 32-bit, 16 for 16-bit, 32 for 8-bit
    sub = 8 * max(1, 4 // itemsize)

    vmem_limit, tile_cap = _tpu_budgets()
    if block_m is None:
        # Per tile row: 2x double-buffered input + 2x output buffers (I/O
        # dtype) plus ~4 live f32-wide intermediates inside the kernel body.
        per_row = N_eff * (4 * itemsize + 16)
        bm_vmem = max(sub, (int(vmem_limit * 0.6) // per_row) // sub * sub)
        # Per-buffer tile size cap: the roofline plateau is already reached
        # at a few MiB; bigger tiles only hurt pipelining.
        bm_tile = max(sub, (tile_cap // (N_eff * itemsize)) // sub * sub)
        # Keep >= ~_MIN_GRID_STEPS grid steps so DMA/compute overlap and the
        # row axis can be sharded across v7x's two TensorCores.
        bm_grid = _round_up(max(1, pl.cdiv(M_rows, _MIN_GRID_STEPS)), sub)
        block_m = min(bm_vmem, bm_tile, bm_grid)
    block_m = max(sub, min(_round_up(block_m, sub), _round_up(M_rows, sub)))

    grid = (pl.cdiv(M_rows, block_m),)

    if fold > 1:
        # Segment-selection matrices, padded to >= 8 columns so MXU operands
        # are never degenerately thin.  Built once on the host (tiny).
        F = _round_up(fold, 8)
        lane_seg = jnp.arange(N_eff, dtype=jnp.int32) // N          # in [0, fold)
        cols = jnp.arange(F, dtype=jnp.int32)
        seg = (lane_seg[:, None] == cols[None, :]).astype(jnp.float32)   # (N_eff, F)
        segt = seg.T                                                     # (F, N_eff)
        kernel = functools.partial(_srmsnorm_folded_kernel, eps=float(eps), n=N)
        in_specs = [
            pl.BlockSpec((block_m, N_eff), lambda i: (i, 0)),
            pl.BlockSpec((N_eff, F), lambda i: (0, 0)),   # resident constant
            pl.BlockSpec((F, N_eff), lambda i: (0, 0)),   # resident constant
        ]
        args = (x2d, seg, segt)
    else:
        kernel = functools.partial(_srmsnorm_kernel, eps=float(eps))
        in_specs = [pl.BlockSpec((block_m, N_eff), lambda i: (i, 0))]
        args = (x2d,)

    y2d = pl.pallas_call(
        kernel,
        out_shape=jax.ShapeDtypeStruct((M_rows, N_eff), x.dtype),
        grid_spec=pltpu.PrefetchScalarGridSpec(
            num_scalar_prefetch=0,
            grid=grid,
            in_specs=in_specs,
            out_specs=pl.BlockSpec((block_m, N_eff), lambda i: (i, 0)),
        ),
        compiler_params=pltpu.CompilerParams(
            dimension_semantics=("parallel",),
            vmem_limit_bytes=vmem_limit,
        ),
    )(*args)

    y = y2d.reshape(M_pad, N)
    if pad_rows:
        y = y[:M]
    return y.reshape(orig_shape)


def _reference(x, eps=1e-6):
    xf = x.astype(jnp.float32)
    var = jnp.mean(xf * xf, axis=-1, keepdims=True)
    return (xf * jax.lax.rsqrt(var + eps)).astype(x.dtype)


if __name__ == "__main__":
    # SimpleRMSNorm(dim=32) on a (batch=2, seq=8, dim=32) input — folded path.
    key = jax.random.PRNGKey(0)
    batch, seq, dim = 2, 8, 32
    x = jax.random.normal(key, (batch, seq, dim), dtype=jnp.float32)
    y = jax.block_until_ready(simple_rms_norm(x, eps=1e-6))
    y_ref = _reference(x, eps=1e-6)
    assert y.shape == x.shape and y.dtype == x.dtype
    assert jnp.allclose(y, y_ref, atol=1e-5, rtol=1e-5)

    # Non-folded path (N multiple of 128) + partial last block.
    x2 = jax.random.normal(jax.random.PRNGKey(1), (3, 5, 256), dtype=jnp.float32)
    y2 = jax.block_until_ready(simple_rms_norm(x2, eps=1e-6, block_m=8))
    assert jnp.allclose(y2, _reference(x2, eps=1e-6), atol=1e-5, rtol=1e-5)

    # bf16 input (16-row sublane packing), folded path with fold=2.
    x3 = jax.random.normal(jax.random.PRNGKey(2), (4, 64), dtype=jnp.bfloat16)
    y3 = jax.block_until_ready(simple_rms_norm(x3, eps=1e-6))
    assert jnp.allclose(
        y3.astype(jnp.float32),
        _reference(x3, eps=1e-6).astype(jnp.float32),
        atol=2e-2, rtol=2e-2,
    )

    # Generalized fold (N=96 -> fold=4), row padding (M=102 -> 104),
    # multi-step grid with a partial last block.
    x4 = jax.random.normal(jax.random.PRNGKey(3), (2, 51, 96), dtype=jnp.float32)
    y4 = jax.block_until_ready(simple_rms_norm(x4, eps=1e-6))
    assert y4.shape == x4.shape
    assert jnp.allclose(y4, _reference(x4, eps=1e-6), atol=1e-5, rtol=1e-5)

    # TODO(synk): backward (srms_norm_bwd_dx_fused) and the saved per-row rstd
    # buffer are not implemented; only the module's forward pass is covered.
    # TODO(synk): no N-axis-splitting fallback for last dims far beyond the
    # Triton 64KB/row limit; a single row block must fit in VMEM.
    print("KERNEL_OK")
</pallas_src>

<mosaic_0001>
module attributes {stable_mosaic.version = 11 : i64} {
  func.func @_srmsnorm_folded_kernel(%arg0: i32, %arg1: memref<8x128xf32, #tpu.memory_space<vmem>>, %arg2: memref<128x8xf32, #tpu.memory_space<vmem>>, %arg3: memref<8x128xf32, #tpu.memory_space<vmem>>, %arg4: memref<8x128xf32, #tpu.memory_space<vmem>>) attributes {dimension_semantics = [#tpu.dimension_semantics<parallel>], iteration_bounds = array<i64: 1>, scalar_prefetch = 0 : i64, scratch_operands = 0 : i64, tpu.core_type = #tpu.core_type<tc>, window_params = [{transform_indices = @transform_0, window_bounds = array<i64: 8, 128>}, {pipeline_mode = #tpu.pipeline_mode<synchronous>, transform_indices = @transform_1, window_bounds = array<i64: 128, 8>}, {pipeline_mode = #tpu.pipeline_mode<synchronous>, transform_indices = @transform_2, window_bounds = array<i64: 8, 128>}, {transform_indices = @transform_3, window_bounds = array<i64: 8, 128>}]} {
    %c0 = arith.constant 0 : index
    %c0_0 = arith.constant 0 : index
    %0 = vector.load %arg1[%c0, %c0_0] : memref<8x128xf32, #tpu.memory_space<vmem>>, vector<8x128xf32>
    %1 = arith.mulf %0, %0 : vector<8x128xf32>
    %c0_1 = arith.constant 0 : index
    %c0_2 = arith.constant 0 : index
    %2 = vector.load %arg2[%c0_1, %c0_2] : memref<128x8xf32, #tpu.memory_space<vmem>>, vector<128x8xf32>
    %cst = arith.constant dense<0.000000e+00> : vector<8x8xf32>
    %3 = tpu.matmul %1, %2, %cst {dimension_numbers = #tpu.dot_dimension_numbers<[1], [0], [0], [1], [0, 0, 1, 1], [], []>} : vector<8x128xf32>, vector<128x8xf32>, vector<8x8xf32> -> vector<8x8xf32>
    %c0_3 = arith.constant 0 : index
    %c0_4 = arith.constant 0 : index
    %4 = vector.load %arg3[%c0_3, %c0_4] : memref<8x128xf32, #tpu.memory_space<vmem>>, vector<8x128xf32>
    %cst_5 = arith.constant dense<0.000000e+00> : vector<8x128xf32>
    %5 = tpu.matmul %3, %4, %cst_5 {dimension_numbers = #tpu.dot_dimension_numbers<[1], [0], [0], [1], [0, 0, 1, 1], [], []>} : vector<8x8xf32>, vector<8x128xf32>, vector<8x128xf32> -> vector<8x128xf32>
    %cst_6 = arith.constant 3.125000e-02 : f32
    %6 = vector.broadcast %cst_6 : f32 to vector<8x128xf32>
    %7 = arith.mulf %5, %6 : vector<8x128xf32>
    %cst_7 = arith.constant 9.99999997E-7 : f32
    %8 = vector.broadcast %cst_7 : f32 to vector<8x128xf32>
    %9 = arith.addf %7, %8 : vector<8x128xf32>
    %10 = math.rsqrt %9 : vector<8x128xf32>
    %11 = arith.mulf %0, %10 : vector<8x128xf32>
    %c0_8 = arith.constant 0 : index
    %c0_9 = arith.constant 0 : index
    %12 = vector.load %arg4[%c0_8, %c0_9] : memref<8x128xf32, #tpu.memory_space<vmem>>, vector<8x128xf32>
    tpu.vector_store %arg4[%c0_8, %c0_9], %11 {strides = array<i32>} : memref<8x128xf32, #tpu.memory_space<vmem>>, vector<8x128xf32>,
    return
  }
  func.func @transform_0(%arg0: i32) -> (i32, i32) {
    %c0_i32 = arith.constant 0 : i32
    %c0_i32_0 = arith.constant 0 : i32
    return %arg0, %c0_i32 : i32, i32
  }
  func.func @transform_1(%arg0: i32) -> (i32, i32) {
    %c0_i32 = arith.constant 0 : i32
    %c0_i32_0 = arith.constant 0 : i32
    %c0_i32_1 = arith.constant 0 : i32
    return %c0_i32, %c0_i32_0 : i32, i32
  }
  func.func @transform_2(%arg0: i32) -> (i32, i32) {
    %c0_i32 = arith.constant 0 : i32
    %c0_i32_0 = arith.constant 0 : i32
    %c0_i32_1 = arith.constant 0 : i32
    return %c0_i32, %c0_i32_0 : i32, i32
  }
  func.func @transform_3(%arg0: i32) -> (i32, i32) {
    %c0_i32 = arith.constant 0 : i32
    %c0_i32_0 = arith.constant 0 : i32
    return %arg0, %c0_i32 : i32, i32
  }
}

</mosaic_0001>

<llo_original>
// kernel: tpu_custom_call.1
$region0: #{tpu_custom_call.1}
  #allocation0 [shape = 'u32[]', space=smem, size = 0x4, offset = 0x4, fixed_abs, tag = 'smem constant byte address 0x4 - core index']
  #allocation1 [shape = 'u32[144,128]{1,0:T(1,128)}', space=vmem, size = 0x12000, scoped, tag = 'internal scratch']
  %s0 = inlined_call_operand.vmem [shape: f32[4,128], index: 0, kind: input, shape index: {}]
  %s1 = inlined_call_operand.vmem [shape: f32[128,8], index: 1, kind: input, shape index: {}]
  %s2 = inlined_call_operand.vmem [shape: f32[8,128], index: 2, kind: input, shape index: {}]
  %s3 = inlined_call_operand.hbm [shape: f32[4,128], index: 3, kind: output, shape index: {}]
  %s4 = sld [smem:[#allocation0]]
  $region22: #{tpu_custom_call.1} parent=0
    _
  %s6 = ssub.s32 1, %s4
  %s7 = scalar_select 0, %s6, %s4
  $region1: #{tpu_custom_call.1} parent=0
    #allocation2 [shape = 'u8[4096]{0}', space=vmem, size = 0x1000, scoped, tag = 'output window, operand 0, single buffered']
    #allocation3 [shape = 's32[1]{0}', space=sflag, size = 0x4, scoped, tag = 'scoped memory for tpu_custom_call.1']
    %8 = vsyncpa [#allocation3], 0
    // Predicated region
    $region2: #{tpu_custom_call.1} parent=1 // pred_check
      _
    $region3: #{tpu_custom_call.1} parent=1 // pred_check_branch
      %10 = sbr.rel (0) target = $region5
    $region4: #{tpu_custom_call.1} parent=1 // pred_region
      _
    $region5: #{tpu_custom_call.1} parent=1 // pred_fallthru
      _
    // Predicated region
    $region6: #{tpu_custom_call.1} parent=1 // pred_check
      _
    $region7: #{tpu_custom_call.1} parent=1 // pred_check_branch
      %12 = sbr.rel (0) target = $region9
    $region8: #{tpu_custom_call.1} parent=1 // pred_region
      _
    $region9: #{tpu_custom_call.1} parent=1 // pred_fallthru
      _
    // Predicated region
    $region10: #{tpu_custom_call.1} parent=1 // pred_check
      _
    $region11: #{tpu_custom_call.1} parent=1 // pred_check_branch
      %14 = sbr.rel (0) target = $region13
    $region12: #{tpu_custom_call.1} parent=1 // pred_region
      _
    $region13: #{tpu_custom_call.1} parent=1 // pred_fallthru
      _
    %v15 = vld [vmem:[%s0] sm:$0xff]
    %v16 = vmul.f32 %v15, %v15
    %v17 = vld [vmem:[%s1] sm:$0xff]
    %v18 = vld [vmem:[%s1 + $0x8] sm:$0xff]
    %v19 = vld [vmem:[%s1 + $0x10] sm:$0xff]
    %v20 = vld [vmem:[%s1 + $0x18] sm:$0xff]
    %v21 = vld [vmem:[%s1 + $0x20] sm:$0xff]
    %v22 = vld [vmem:[%s1 + $0x28] sm:$0xff]
    %v23 = vld [vmem:[%s1 + $0x30] sm:$0xff]
    %v24 = vld [vmem:[%s1 + $0x38] sm:$0xff]
    %v25 = vld [vmem:[%s1 + $0x40] sm:$0xff]
    %v26 = vld [vmem:[%s1 + $0x48] sm:$0xff]
    %v27 = vld [vmem:[%s1 + $0x50] sm:$0xff]
    %v28 = vld [vmem:[%s1 + $0x58] sm:$0xff]
    %v29 = vld [vmem:[%s1 + $0x60] sm:$0xff]
    %v30 = vld [vmem:[%s1 + $0x68] sm:$0xff]
    %v31 = vld [vmem:[%s1 + $0x70] sm:$0xff]
    %v32 = vld [vmem:[%s1 + $0x78] sm:$0xff]
    %33 = vmatprep.subr.mxu0 0.0
    %34 = vmatpush1.msra.mxu0 %v32
    %35 = vmatprep.subr.mxu0 0.0
    %36 = vmatpush1.msra.mxu0 %v31
    %37 = vmatprep.subr.mxu0 0.0
    %38 = vmatpush1.msra.mxu0 %v30
    %39 = vmatprep.subr.mxu0 0.0
    %40 = vmatpush1.msra.mxu0 %v29
    %41 = vmatprep.subr.mxu0 0.0
    %42 = vmatpush1.msra.mxu0 %v28
    %43 = vmatprep.subr.mxu0 0.0
    %44 = vmatpush1.msra.mxu0 %v27
    %45 = vmatprep.subr.mxu0 0.0
    %46 = vmatpush1.msra.mxu0 %v26
    %47 = vmatprep.subr.mxu0 0.0
    %48 = vmatpush1.msra.mxu0 %v25
    %49 = vmatprep.subr.mxu0 0.0
    %50 = vmatpush1.msra.mxu0 %v24
    %51 = vmatprep.subr.mxu0 0.0
    %52 = vmatpush1.msra.mxu0 %v23
    %53 = vmatprep.subr.mxu0 0.0
    %54 = vmatpush1.msra.mxu0 %v22
    %55 = vmatprep.subr.mxu0 0.0
    %56 = vmatpush1.msra.mxu0 %v21
    %57 = vmatprep.subr.mxu0 0.0
    %58 = vmatpush1.msra.mxu0 %v20
    %59 = vmatprep.subr.mxu0 0.0
    %60 = vmatpush1.msra.mxu0 %v19
    %61 = vmatprep.subr.mxu0 0.0
    %62 = vmatpush1.msra.mxu0 %v18
    %63 = vmatprep.subr.mxu0 0.0
    %64 = vmatpush1.msra.mxu0 %v17
    %65 = vmatprep.subr.mxu0 0.0
    %66 = vmatpush2.msra.mxu0 0.0
    %67 = vmatprep.subr.mxu0 0.0
    %68 = vmatpush2.msra.mxu0 0.0
    %69 = vmatprep.subr.mxu0 0.0
    %70 = vmatpush2.msra.mxu0 0.0
    %71 = vmatprep.subr.mxu0 0.0
    %72 = vmatpush2.msra.mxu0 0.0
    %73 = vmatprep.subr.mxu0 0.0
    %74 = vmatpush2.msra.mxu0 0.0
    %75 = vmatprep.subr.mxu0 0.0
    %76 = vmatpush2.msra.mxu0 0.0
    %77 = vmatprep.subr.mxu0 0.0
    %78 = vmatpush2.msra.mxu0 0.0
    %79 = vmatprep.subr.mxu0 0.0
    %80 = vmatpush2.msra.mxu0 0.0
    %81 = vmatprep.subr.mxu0 0.0
    %82 = vmatpush2.msra.mxu0 0.0
    %83 = vmatprep.subr.mxu0 0.0
    %84 = vmatpush2.msra.mxu0 0.0
    %85 = vmatprep.subr.mxu0 0.0
    %86 = vmatpush2.msra.mxu0 0.0
    %87 = vmatprep.subr.mxu0 0.0
    %88 = vmatpush2.msra.mxu0 0.0
    %89 = vmatprep.subr.mxu0 0.0
    %90 = vmatpush2.msra.mxu0 0.0
    %91 = vmatprep.subr.mxu0 0.0
    %92 = vmatpush2.msra.mxu0 0.0
    %93 = vmatprep.subr.mxu0 0.0
    %94 = vmatpush2.msra.mxu0 0.0
    %95 = vmatprep.subr.mxu0 0.0
    %96 = vmatpush2.msra.mxu0 0.0
    %97 = vmatprep.mubr.f32.mxu0 0.0
    %98 = vmatmul.mubr.f32.gmra.mxu0 %v16
    %v99 = vpop.f32.mrf.mxu0
    %v100 = vadd.f32 0.0, %v99
    %v101 = vpop.f32.mrf.mxu0
    %102 = vdwg.mxu0
    %v103 = vld [vmem:[%s2] sm:$0xff]
    %vm104 = vcmask 64512
    %v106 = vsel %vm104, %v100, 0
    %108 = vmatprep.subr.mxu0 0.0
    %109 = vmatpush1.msra.mxu0 0.0
    %110 = vmatprep.subr.mxu0 0.0
    %111 = vmatpush1.msra.mxu0 0.0
    %112 = vmatprep.subr.mxu0 0.0
    %113 = vmatpush1.msra.mxu0 0.0
    %114 = vmatprep.subr.mxu0 0.0
    %115 = vmatpush1.msra.mxu0 0.0
    %116 = vmatprep.subr.mxu0 0.0
    %117 = vmatpush1.msra.mxu0 0.0
    %118 = vmatprep.subr.mxu0 0.0
    %119 = vmatpush1.msra.mxu0 0.0
    %120 = vmatprep.subr.mxu0 0.0
    %121 = vmatpush1.msra.mxu0 0.0
    %122 = vmatprep.subr.mxu0 0.0
    %123 = vmatpush1.msra.mxu0 0.0
    %124 = vmatprep.subr.mxu0 0.0
    %125 = vmatpush1.msra.mxu0 0.0
    %126 = vmatprep.subr.mxu0 0.0
    %127 = vmatpush1.msra.mxu0 0.0
    %128 = vmatprep.subr.mxu0 0.0
    %129 = vmatpush1.msra.mxu0 0.0
    %130 = vmatprep.subr.mxu0 0.0
    %131 = vmatpush1.msra.mxu0 0.0
    %132 = vmatprep.subr.mxu0 0.0
    %133 = vmatpush1.msra.mxu0 0.0
    %134 = vmatprep.subr.mxu0 0.0
    %135 = vmatpush1.msra.mxu0 0.0
    %136 = vmatprep.subr.mxu0 0.0
    %137 = vmatpush1.msra.mxu0 0.0
    %138 = vmatprep.subr.mxu0 0.0
    %139 = vmatpush1.msra.mxu0 %v103
    %140 = vmatprep.subr.mxu0 0.0
    %141 = vmatpush2.msra.mxu0 0.0
    %142 = vmatprep.subr.mxu0 0.0
    %143 = vmatpush2.msra.mxu0 0.0
    %144 = vmatprep.subr.mxu0 0.0
    %145 = vmatpush2.msra.mxu0 0.0
    %146 = vmatprep.subr.mxu0 0.0
    %147 = vmatpush2.msra.mxu0 0.0
    %148 = vmatprep.subr.mxu0 0.0
    %149 = vmatpush2.msra.mxu0 0.0
    %150 = vmatprep.subr.mxu0 0.0
    %151 = vmatpush2.msra.mxu0 0.0
    %152 = vmatprep.subr.mxu0 0.0
    %153 = vmatpush2.msra.mxu0 0.0
    %154 = vmatprep.subr.mxu0 0.0
    %155 = vmatpush2.msra.mxu0 0.0
    %156 = vmatprep.subr.mxu0 0.0
    %157 = vmatpush2.msra.mxu0 0.0
    %158 = vmatprep.subr.mxu0 0.0
    %159 = vmatpush2.msra.mxu0 0.0
    %160 = vmatprep.subr.mxu0 0.0
    %161 = vmatpush2.msra.mxu0 0.0
    %162 = vmatprep.subr.mxu0 0.0
    %163 = vmatpush2.msra.mxu0 0.0
    %164 = vmatprep.subr.mxu0 0.0
    %165 = vmatpush2.msra.mxu0 0.0
    %166 = vmatprep.subr.mxu0 0.0
    %167 = vmatpush2.msra.mxu0 0.0
    %168 = vmatprep.subr.mxu0 0.0
    %169 = vmatpush2.msra.mxu0 0.0
    %170 = vmatprep.subr.mxu0 0.0
    %171 = vmatpush2.msra.mxu0 0.0
    %172 = vmatprep.mubr.f32.mxu0 0.0
    %173 = vmatmul.mubr.f32.gmra.mxu0 %v106
    %v174 = vpop.f32.mrf.mxu0
    %v175 = vadd.f32 0.0, %v174
    %v176 = vpop.f32.mrf.mxu0
    %177 = vdwg.mxu0
    %v178 = vmul.f32 %v175, 0.03125
    %v179 = vadd.f32 %v178, 1e-06
    %v180 = vrsqrt.pop %v179
    %v181 = vmul.f32 %v15, %v180
    %182 = vst [vmem:[#allocation2] sm:$0xff] %v181
    // Predicated region
    $region14: #{tpu_custom_call.1} parent=1 // pred_check
      _
    $region15: #{tpu_custom_call.1} parent=1 // pred_check_branch
      %184 = sbr.rel (0) target = $region17
    $region16: #{tpu_custom_call.1} parent=1 // pred_region
      %s186 = ssub.s32 128, 64
      %187 = vsyncadd [#allocation3], %s186
      %s188 = sshll.u32 [#allocation2], 4
      %s189 = int_to_ptr.vmem [resolvable:$true] %s188
      %194 = dma.vmem_to_hbm [thread:$0]  %s189, 64, %s3, [#allocation3], 64, 64, 4
    $region17: #{tpu_custom_call.1} parent=1 // pred_fallthru
      _
    // Predicated region
    $region18: #{tpu_custom_call.1} parent=1 // pred_check
      _
    $region19: #{tpu_custom_call.1} parent=1 // pred_check_branch
      %196 = sbr.rel (0) target = $region21
    $region20: #{tpu_custom_call.1} parent=1 // pred_region
      %197 = dma.done [#allocation3], 128
    $region21: #{tpu_custom_call.1} parent=1 // pred_fallthru
      _
    %198 = vsyncpa [#allocation3], 1

</llo_original>
